<compile_context>
chip_gen: v6e
topology: v6e:2x2x1
jax: 0.10.0
libtpu: 0.0.40
codegen_flags: <defaults>
</compile_context>

<pallas_src>
import functools

import jax
import jax.numpy as jnp
from jax import lax
from jax.experimental import pallas as pl
from jax.experimental.pallas import tpu as pltpu

HIDDEN = 40      # fixed by the module definition
H_PAD = 128      # hidden dim padded to lane width
A_PAD = 128      # action dim padded to lane width (lane-dense output slab)


def _round_up(x, m):
    return (x + m - 1) // m * m


def _actor_kernel(x_ref, w1_ref, b1_ref, w2_ref, b2_ref, w3_ref, b3_ref,
                  probs_ref, *, action_size):
    x = x_ref[...]                                           # [TB, S] bf16

    # linear1 + sigmoid (bf16 MXU, f32 accumulate; elementwise in f32)
    h1 = jnp.dot(x, w1_ref[...], preferred_element_type=jnp.float32)
    h1 = jax.nn.sigmoid(h1 + b1_ref[...])                    # [TB, 128] f32

    # linear2 (no activation, matching the reference module)
    h2 = jnp.dot(h1.astype(jnp.bfloat16), w2_ref[...],
                 preferred_element_type=jnp.float32)
    h2 = h2 + b2_ref[...]                                    # [TB, 128] f32

    # linear3 -> logits; padded action columns masked out of the softmax
    logits = jnp.dot(h2.astype(jnp.bfloat16), w3_ref[...],
                     preferred_element_type=jnp.float32)
    logits = logits + b3_ref[...]                            # [TB, 128] f32
    col = lax.broadcasted_iota(jnp.int32, logits.shape, 1)
    logits = jnp.where(col < action_size, logits, -1e30)

    # numerically stable softmax; reciprocal runs on the EUP slot
    m = jnp.max(logits, axis=-1, keepdims=True)
    e = jnp.exp(logits - m)
    denom = jnp.sum(e, axis=-1, keepdims=True)
    inv = pl.reciprocal(denom, approx=True)
    probs_ref[...] = (e * inv).astype(probs_ref.dtype)


def actor_forward(state, padded_params, action_size, *, tb=512):
    """Returns Categorical probabilities, shape [B, action_size], f32."""
    w1, b1, w2, b2, w3, b3 = padded_params
    B, S = state.shape

    TB = min(tb, _round_up(B, 8))          # batch tile (rows), multiple of 8
    nb = pl.cdiv(B, TB)
    B_pad = nb * TB

    x = state.astype(jnp.bfloat16)         # halve HBM bytes for the streamed operand
    if B_pad != B:
        x = jnp.pad(x, ((0, B_pad - B), (0, 0)))   # tail tile: zero rows, sliced off below

    const = lambda shape: pl.BlockSpec(shape, lambda i: (0, 0))
    kernel = functools.partial(_actor_kernel, action_size=action_size)

    probs = pl.pallas_call(
        kernel,
        out_shape=jax.ShapeDtypeStruct((B_pad, A_PAD), jnp.float32),
        grid=(nb,),
        in_specs=[
            pl.BlockSpec((TB, S), lambda i: (i, 0)),     # state, tiled over batch
            const((S, H_PAD)), const((1, H_PAD)),        # linear1 (loop-invariant)
            const((H_PAD, H_PAD)), const((1, H_PAD)),    # linear2
            const((H_PAD, A_PAD)), const((1, A_PAD)),    # linear3
        ],
        out_specs=pl.BlockSpec((TB, A_PAD), lambda i: (i, 0)),
        compiler_params=pltpu.CompilerParams(
            dimension_semantics=("parallel",)),          # megacore-shardable batch axis
    )(x, w1, b1, w2, b2, w3, b3)

    return probs[:B, :action_size]


def init_actor_params(key, state_size, action_size):
    """Deterministic init mimicking nn.Linear's uniform(-1/sqrt(fan_in), ...)."""
    def linear(k, fan_in, fan_out):
        kw, kb = jax.random.split(k)
        bound = 1.0 / jnp.sqrt(fan_in)
        # stored as [in, out] so the kernel computes x @ W + b
        w = jax.random.uniform(kw, (fan_in, fan_out), jnp.float32, -bound, bound)
        b = jax.random.uniform(kb, (1, fan_out), jnp.float32, -bound, bound)
        return w, b

    k1, k2, k3 = jax.random.split(key, 3)
    w1, b1 = linear(k1, state_size, HIDDEN)
    w2, b2 = linear(k2, HIDDEN, HIDDEN)
    w3, b3 = linear(k3, HIDDEN, action_size)
    return (w1, b1, w2, b2, w3, b3)


def prepare_actor_params(params):
    """Zero-pad feature dims to lane width and cast MXU operands to bf16.

    Zero-padded rows/cols keep the math exact (padded h1 lanes hit zero rows
    of w2; padded logit columns are masked in-kernel before the softmax).
    """
    w1, b1, w2, b2, w3, b3 = params

    def pad2(a, rows, cols):
        r, c = a.shape
        return jnp.pad(a, ((0, rows - r), (0, cols - c)))

    S = w1.shape[0]
    w1p = pad2(w1, S, H_PAD).astype(jnp.bfloat16)
    w2p = pad2(w2, H_PAD, H_PAD).astype(jnp.bfloat16)
    w3p = pad2(w3, H_PAD, A_PAD).astype(jnp.bfloat16)
    b1p = pad2(b1, 1, H_PAD)        # biases stay f32 (added post-dot)
    b2p = pad2(b2, 1, H_PAD)
    b3p = pad2(b3, 1, A_PAD)
    return (w1p, b1p, w2p, b2p, w3p, b3p)


if __name__ == "__main__":
    key = jax.random.PRNGKey(0)
    kp, kx = jax.random.split(key)

    batch = 8
    state_size = 4       # CartPole-like state
    action_size = 2

    raw_params = init_actor_params(kp, state_size, action_size)
    params = prepare_actor_params(raw_params)
    state = jax.random.normal(kx, (batch, state_size), jnp.float32)

    probs = actor_forward(state, params, action_size)
    probs = jax.block_until_ready(probs)

    # Pure-JAX reference of the same math (bf16 MXU operands, f32 accumulate).
    w1, b1, w2, b2, w3, b3 = raw_params
    xb = state.astype(jnp.bfloat16)
    h1 = jax.nn.sigmoid(
        jnp.dot(xb, w1.astype(jnp.bfloat16),
                preferred_element_type=jnp.float32) + b1)
    h2 = jnp.dot(h1.astype(jnp.bfloat16), w2.astype(jnp.bfloat16),
                 preferred_element_type=jnp.float32) + b2
    logits = jnp.dot(h2.astype(jnp.bfloat16), w3.astype(jnp.bfloat16),
                     preferred_element_type=jnp.float32) + b3
    ref = jax.nn.softmax(logits, axis=-1)

    assert probs.shape == (batch, action_size)
    assert jnp.allclose(probs, ref, atol=3e-3, rtol=3e-3), "mismatch vs reference"
    assert jnp.allclose(jnp.sum(probs, axis=-1), 1.0, atol=2e-3)

    # TODO(synk): Categorical sampling / log_prob utilities live outside the
    # kernel; the kernel returns the probabilities that define the distribution.
    print("KERNEL_OK")
</pallas_src>

<mosaic_0001>
module attributes {stable_mosaic.version = 11 : i64} {
  func.func @_actor_kernel(%arg0: i32, %arg1: memref<8x4xbf16, #tpu.memory_space<vmem>>, %arg2: memref<4x128xbf16, #tpu.memory_space<vmem>>, %arg3: memref<1x128xf32, #tpu.memory_space<vmem>>, %arg4: memref<128x128xbf16, #tpu.memory_space<vmem>>, %arg5: memref<1x128xf32, #tpu.memory_space<vmem>>, %arg6: memref<128x128xbf16, #tpu.memory_space<vmem>>, %arg7: memref<1x128xf32, #tpu.memory_space<vmem>>, %arg8: memref<8x128xf32, #tpu.memory_space<vmem>>) attributes {dimension_semantics = [#tpu.dimension_semantics<parallel>], iteration_bounds = array<i64: 1>, scalar_prefetch = 0 : i64, scratch_operands = 0 : i64, tpu.core_type = #tpu.core_type<tc>, window_params = [{transform_indices = @transform_0, window_bounds = array<i64: 8, 4>}, {pipeline_mode = #tpu.pipeline_mode<synchronous>, transform_indices = @transform_1, window_bounds = array<i64: 4, 128>}, {pipeline_mode = #tpu.pipeline_mode<synchronous>, transform_indices = @transform_2, window_bounds = array<i64: 1, 128>}, {pipeline_mode = #tpu.pipeline_mode<synchronous>, transform_indices = @transform_3, window_bounds = array<i64: 128, 128>}, {pipeline_mode = #tpu.pipeline_mode<synchronous>, transform_indices = @transform_4, window_bounds = array<i64: 1, 128>}, {pipeline_mode = #tpu.pipeline_mode<synchronous>, transform_indices = @transform_5, window_bounds = array<i64: 128, 128>}, {pipeline_mode = #tpu.pipeline_mode<synchronous>, transform_indices = @transform_6, window_bounds = array<i64: 1, 128>}, {transform_indices = @transform_7, window_bounds = array<i64: 8, 128>}]} {
    %c0 = arith.constant 0 : index
    %c0_0 = arith.constant 0 : index
    %0 = vector.load %arg1[%c0, %c0_0] : memref<8x4xbf16, #tpu.memory_space<vmem>>, vector<8x4xbf16>
    %c0_1 = arith.constant 0 : index
    %c0_2 = arith.constant 0 : index
    %1 = vector.load %arg2[%c0_1, %c0_2] : memref<4x128xbf16, #tpu.memory_space<vmem>>, vector<4x128xbf16>
    %cst = arith.constant dense<0.000000e+00> : vector<8x128xf32>
    %2 = tpu.matmul %0, %1, %cst {dimension_numbers = #tpu.dot_dimension_numbers<[1], [0], [0], [1], [0, 0, 1, 1], [], []>} : vector<8x4xbf16>, vector<4x128xbf16>, vector<8x128xf32> -> vector<8x128xf32>
    %c0_3 = arith.constant 0 : index
    %c0_4 = arith.constant 0 : index
    %3 = vector.load %arg3[%c0_3, %c0_4] : memref<1x128xf32, #tpu.memory_space<vmem>>, vector<1x128xf32>
    %4 = vector.broadcast %3 : vector<1x128xf32> to vector<8x128xf32>
    %5 = arith.addf %2, %4 : vector<8x128xf32>
    %6 = arith.negf %5 : vector<8x128xf32>
    %7 = math.exp %6 : vector<8x128xf32>
    %cst_5 = arith.constant 1.000000e+00 : f32
    %8 = vector.broadcast %cst_5 : f32 to vector<8x128xf32>
    %9 = arith.addf %8, %7 : vector<8x128xf32>
    %10 = arith.divf %8, %9 : vector<8x128xf32>
    %11 = arith.truncf %10 : vector<8x128xf32> to vector<8x128xbf16>
    %c0_6 = arith.constant 0 : index
    %c0_7 = arith.constant 0 : index
    %12 = vector.load %arg4[%c0_6, %c0_7] : memref<128x128xbf16, #tpu.memory_space<vmem>>, vector<128x128xbf16>
    %cst_8 = arith.constant dense<0.000000e+00> : vector<8x128xf32>
    %13 = tpu.matmul %11, %12, %cst_8 {dimension_numbers = #tpu.dot_dimension_numbers<[1], [0], [0], [1], [0, 0, 1, 1], [], []>} : vector<8x128xbf16>, vector<128x128xbf16>, vector<8x128xf32> -> vector<8x128xf32>
    %c0_9 = arith.constant 0 : index
    %c0_10 = arith.constant 0 : index
    %14 = vector.load %arg5[%c0_9, %c0_10] : memref<1x128xf32, #tpu.memory_space<vmem>>, vector<1x128xf32>
    %15 = vector.broadcast %14 : vector<1x128xf32> to vector<8x128xf32>
    %16 = arith.addf %13, %15 : vector<8x128xf32>
    %17 = arith.truncf %16 : vector<8x128xf32> to vector<8x128xbf16>
    %c0_11 = arith.constant 0 : index
    %c0_12 = arith.constant 0 : index
    %18 = vector.load %arg6[%c0_11, %c0_12] : memref<128x128xbf16, #tpu.memory_space<vmem>>, vector<128x128xbf16>
    %cst_13 = arith.constant dense<0.000000e+00> : vector<8x128xf32>
    %19 = tpu.matmul %17, %18, %cst_13 {dimension_numbers = #tpu.dot_dimension_numbers<[1], [0], [0], [1], [0, 0, 1, 1], [], []>} : vector<8x128xbf16>, vector<128x128xbf16>, vector<8x128xf32> -> vector<8x128xf32>
    %c0_14 = arith.constant 0 : index
    %c0_15 = arith.constant 0 : index
    %20 = vector.load %arg7[%c0_14, %c0_15] : memref<1x128xf32, #tpu.memory_space<vmem>>, vector<1x128xf32>
    %21 = vector.broadcast %20 : vector<1x128xf32> to vector<8x128xf32>
    %22 = arith.addf %19, %21 : vector<8x128xf32>
    %23 = tpu.iota {dimensions = array<i32: 1>} : vector<8x128xi32>
    %c2_i32 = arith.constant 2 : i32
    %24 = vector.broadcast %c2_i32 : i32 to vector<8x128xi32>
    %25 = arith.cmpi slt, %23, %24 : vector<8x128xi32>
    %cst_16 = arith.constant -1.000000e+30 : f32
    %26 = vector.broadcast %cst_16 : f32 to vector<8x128xf32>
    %27 = arith.select %25, %22, %26 : vector<8x128xi1>, vector<8x128xf32>
    %cst_17 = arith.constant dense<0xFF800000> : vector<8xf32>
    %28 = vector.multi_reduction <maximumf>, %27, %cst_17 [1] : vector<8x128xf32> to vector<8xf32>
    %29 = vector.shape_cast %28 : vector<8xf32> to vector<8x1xf32>
    %30 = vector.broadcast %29 : vector<8x1xf32> to vector<8x128xf32>
    %31 = arith.subf %27, %30 : vector<8x128xf32>
    %32 = math.exp %31 : vector<8x128xf32>
    %cst_18 = arith.constant dense<0.000000e+00> : vector<8xf32>
    %33 = vector.multi_reduction <add>, %32, %cst_18 [1] : vector<8x128xf32> to vector<8xf32>
    %34 = vector.shape_cast %33 : vector<8xf32> to vector<8x1xf32>
    %35 = tpu.reciprocal %34 {approx = true} : vector<8x1xf32> -> vector<8x1xf32>
    %36 = vector.broadcast %35 : vector<8x1xf32> to vector<8x128xf32>
    %37 = arith.mulf %32, %36 : vector<8x128xf32>
    %c0_19 = arith.constant 0 : index
    %c0_20 = arith.constant 0 : index
    %38 = vector.load %arg8[%c0_19, %c0_20] : memref<8x128xf32, #tpu.memory_space<vmem>>, vector<8x128xf32>
    tpu.vector_store %arg8[%c0_19, %c0_20], %37 {strides = array<i32>} : memref<8x128xf32, #tpu.memory_space<vmem>>, vector<8x128xf32>,
    return
  }
  func.func @transform_0(%arg0: i32) -> (i32, i32) {
    %c0_i32 = arith.constant 0 : i32
    %c0_i32_0 = arith.constant 0 : i32
    return %arg0, %c0_i32 : i32, i32
  }
  func.func @transform_1(%arg0: i32) -> (i32, i32) {
    %c0_i32 = arith.constant 0 : i32
    %c0_i32_0 = arith.constant 0 : i32
    %c0_i32_1 = arith.constant 0 : i32
    return %c0_i32, %c0_i32_0 : i32, i32
  }
  func.func @transform_2(%arg0: i32) -> (i32, i32) {
    %c0_i32 = arith.constant 0 : i32
    %c0_i32_0 = arith.constant 0 : i32
    %c0_i32_1 = arith.constant 0 : i32
    return %c0_i32, %c0_i32_0 : i32, i32
  }
  func.func @transform_3(%arg0: i32) -> (i32, i32) {
    %c0_i32 = arith.constant 0 : i32
    %c0_i32_0 = arith.constant 0 : i32
    %c0_i32_1 = arith.constant 0 : i32
    return %c0_i32, %c0_i32_0 : i32, i32
  }
  func.func @transform_4(%arg0: i32) -> (i32, i32) {
    %c0_i32 = arith.constant 0 : i32
    %c0_i32_0 = arith.constant 0 : i32
    %c0_i32_1 = arith.constant 0 : i32
    return %c0_i32, %c0_i32_0 : i32, i32
  }
  func.func @transform_5(%arg0: i32) -> (i32, i32) {
    %c0_i32 = arith.constant 0 : i32
    %c0_i32_0 = arith.constant 0 : i32
    %c0_i32_1 = arith.constant 0 : i32
    return %c0_i32, %c0_i32_0 : i32, i32
  }
  func.func @transform_6(%arg0: i32) -> (i32, i32) {
    %c0_i32 = arith.constant 0 : i32
    %c0_i32_0 = arith.constant 0 : i32
    %c0_i32_1 = arith.constant 0 : i32
    return %c0_i32, %c0_i32_0 : i32, i32
  }
  func.func @transform_7(%arg0: i32) -> (i32, i32) {
    %c0_i32 = arith.constant 0 : i32
    %c0_i32_0 = arith.constant 0 : i32
    return %arg0, %c0_i32 : i32, i32
  }
}

</mosaic_0001>

<llo_original>
// kernel: tpu_custom_call.1
$region0: #{tpu_custom_call.1}
  #allocation0 [shape = 'u32[]', space=smem, size = 0x4, offset = 0x4, fixed_abs, tag = 'smem constant byte address 0x4 - core index']
  #allocation1 [shape = 'u32[144,128]{1,0:T(1,128)}', space=vmem, size = 0x12000, scoped, tag = 'internal scratch']
  %s0 = inlined_call_operand.vmem [shape: bf16[8,4], index: 0, kind: input, shape index: {}]
  %s1 = inlined_call_operand.vmem [shape: bf16[4,128], index: 1, kind: input, shape index: {}]
  %s2 = inlined_call_operand.vmem [shape: f32[1,128], index: 2, kind: input, shape index: {}]
  %s3 = inlined_call_operand.hbm [shape: bf16[128,128], index: 3, kind: input, shape index: {}]
  %s4 = inlined_call_operand.vmem [shape: f32[1,128], index: 4, kind: input, shape index: {}]
  %s5 = inlined_call_operand.hbm [shape: bf16[128,128], index: 5, kind: input, shape index: {}]
  %s6 = inlined_call_operand.vmem [shape: f32[1,128], index: 6, kind: input, shape index: {}]
  %s7 = inlined_call_operand.hbm [shape: f32[8,128], index: 7, kind: output, shape index: {}]
  %s8 = sld [smem:[#allocation0]]
  $region46: #{tpu_custom_call.1} parent=0
    _
  %s10 = ssub.s32 1, %s8
  %s11 = scalar_select 0, %s10, %s8
  $region1: #{tpu_custom_call.1} parent=0
    #allocation2 [shape = 'u8[32768]{0}', space=vmem, size = 0x8000, scoped, tag = 'input window, operand 3, single buffered']
    #allocation3 [shape = 's32[1]{0}', space=sflag, size = 0x4, scoped, tag = 'scoped memory for tpu_custom_call.1']
    #allocation4 [shape = 's32[1]{0}', space=sflag, size = 0x4, scoped, tag = 'scoped memory for tpu_custom_call.1']
    #allocation5 [shape = 'u8[32768]{0}', space=vmem, size = 0x8000, scoped, tag = 'input window, operand 5, single buffered']
    #allocation6 [shape = 's32[1]{0}', space=sflag, size = 0x4, scoped, tag = 'scoped memory for tpu_custom_call.1']
    #allocation7 [shape = 'u8[4096]{0}', space=vmem, size = 0x1000, scoped, tag = 'output window, operand 0, single buffered']
    %12 = vsyncpa [#allocation3], 0
    %13 = vsyncpa [#allocation6], 0
    %14 = vsyncpa [#allocation4], 0
    // Predicated region
    $region2: #{tpu_custom_call.1} parent=1 // pred_check
      _
    $region3: #{tpu_custom_call.1} parent=1 // pred_check_branch
      %16 = sbr.rel (0) target = $region5
    $region4: #{tpu_custom_call.1} parent=1 // pred_region
      _
    $region5: #{tpu_custom_call.1} parent=1 // pred_fallthru
      _
    // Predicated region
    $region6: #{tpu_custom_call.1} parent=1 // pred_check
      _
    $region7: #{tpu_custom_call.1} parent=1 // pred_check_branch
      %18 = sbr.rel (0) target = $region9
    $region8: #{tpu_custom_call.1} parent=1 // pred_region
      _
    $region9: #{tpu_custom_call.1} parent=1 // pred_fallthru
      _
    // Predicated region
    $region10: #{tpu_custom_call.1} parent=1 // pred_check
      _
    $region11: #{tpu_custom_call.1} parent=1 // pred_check_branch
      %20 = sbr.rel (0) target = $region13
    $region12: #{tpu_custom_call.1} parent=1 // pred_region
      _
    $region13: #{tpu_custom_call.1} parent=1 // pred_fallthru
      _
    // Predicated region
    $region14: #{tpu_custom_call.1} parent=1 // pred_check
      _
    $region15: #{tpu_custom_call.1} parent=1 // pred_check_branch
      %22 = sbr.rel (0) target = $region17
    $region16: #{tpu_custom_call.1} parent=1 // pred_region
      %s24 = ssub.s32 1024, 1024
      %25 = vsyncadd [#allocation3], %s24
      %s26 = sshll.u32 [#allocation2], 4
      %s27 = int_to_ptr.vmem [resolvable:$true] %s26
      %32 = dma.hbm_to_vmem [thread:$0]  %s3, 1024, %s27, [#allocation3], 64, 64, 4
    $region17: #{tpu_custom_call.1} parent=1 // pred_fallthru
      _
    // Predicated region
    $region18: #{tpu_custom_call.1} parent=1 // pred_check
      _
    $region19: #{tpu_custom_call.1} parent=1 // pred_check_branch
      %34 = sbr.rel (0) target = $region21
    $region20: #{tpu_custom_call.1} parent=1 // pred_region
      _
    $region21: #{tpu_custom_call.1} parent=1 // pred_fallthru
      _
    // Predicated region
    $region22: #{tpu_custom_call.1} parent=1 // pred_check
      _
    $region23: #{tpu_custom_call.1} parent=1 // pred_check_branch
      %36 = sbr.rel (0) target = $region25
    $region24: #{tpu_custom_call.1} parent=1 // pred_region
      %s38 = ssub.s32 1024, 1024
      %39 = vsyncadd [#allocation6], %s38
      %s40 = sshll.u32 [#allocation5], 4
      %s41 = int_to_ptr.vmem [resolvable:$true] %s40
      %46 = dma.hbm_to_vmem [thread:$0]  %s5, 1024, %s41, [#allocation6], 64, 64, 4
    $region25: #{tpu_custom_call.1} parent=1 // pred_fallthru
      _
    // Predicated region
    $region26: #{tpu_custom_call.1} parent=1 // pred_check
      _
    $region27: #{tpu_custom_call.1} parent=1 // pred_check_branch
      %48 = sbr.rel (0) target = $region29
    $region28: #{tpu_custom_call.1} parent=1 // pred_region
      _
    $region29: #{tpu_custom_call.1} parent=1 // pred_fallthru
      _
    // Predicated region
    $region30: #{tpu_custom_call.1} parent=1 // pred_check
      _
    $region31: #{tpu_custom_call.1} parent=1 // pred_check_branch
      %50 = sbr.rel (0) target = $region33
    $region32: #{tpu_custom_call.1} parent=1 // pred_region
      %51 = dma.done [#allocation3], 1024
    $region33: #{tpu_custom_call.1} parent=1 // pred_fallthru
      _
    // Predicated region
    $region34: #{tpu_custom_call.1} parent=1 // pred_check
      _
    $region35: #{tpu_custom_call.1} parent=1 // pred_check_branch
      %53 = sbr.rel (0) target = $region37
    $region36: #{tpu_custom_call.1} parent=1 // pred_region
      %54 = dma.done [#allocation6], 1024
    $region37: #{tpu_custom_call.1} parent=1 // pred_fallthru
      _
    %v56 = vld [vmem:[%s0] sm:$0xf]
    %v57 = vld [vmem:[%s1] sm:$0x3]
    %v58 = vld [vmem:[%s2] sm:$0x1]
    %v60 = vlaneseq
    %v61 = vshrl.u32 %v60, 7
    %v62 = vsub.s32 0, %v61
    %v63 = vrot.slane %v58, %v62
    %vm65 = vcmask 31744
    %v67 = vsel %vm65, %v56, 0
    %vm69 = vcmask 1041408
    %v71 = vsel %vm69, %v57, 0
    %73 = vmatprep.subr.bf16.mxu0 0
    %74 = vmatpush1.bf16.msra.mxu0 0
    %75 = vmatprep.subr.bf16.mxu0 0
    %76 = vmatpush1.bf16.msra.mxu0 0
    %77 = vmatprep.subr.bf16.mxu0 0
    %78 = vmatpush1.bf16.msra.mxu0 0
    %79 = vmatprep.subr.bf16.mxu0 0
    %80 = vmatpush1.bf16.msra.mxu0 0
    %81 = vmatprep.subr.bf16.mxu0 0
    %82 = vmatpush1.bf16.msra.mxu0 0
    %83 = vmatprep.subr.bf16.mxu0 0
    %84 = vmatpush1.bf16.msra.mxu0 0
    %85 = vmatprep.subr.bf16.mxu0 0
    %86 = vmatpush1.bf16.msra.mxu0 0
    %87 = vmatprep.subr.bf16.mxu0 0
    %88 = vmatpush1.bf16.msra.mxu0 %v71
    %89 = vmatprep.subr.bf16.mxu0 0
    %90 = vmatpush2.bf16.msra.mxu0 0
    %91 = vmatprep.subr.bf16.mxu0 0
    %92 = vmatpush2.bf16.msra.mxu0 0
    %93 = vmatprep.subr.bf16.mxu0 0
    %94 = vmatpush2.bf16.msra.mxu0 0
    %95 = vmatprep.subr.bf16.mxu0 0
    %96 = vmatpush2.bf16.msra.mxu0 0
    %97 = vmatprep.subr.bf16.mxu0 0
    %98 = vmatpush2.bf16.msra.mxu0 0
    %99 = vmatprep.subr.bf16.mxu0 0
    %100 = vmatpush2.bf16.msra.mxu0 0
    %101 = vmatprep.subr.bf16.mxu0 0
    %102 = vmatpush2.bf16.msra.mxu0 0
    %103 = vmatprep.subr.bf16.mxu0 0
    %104 = vmatpush2.bf16.msra.mxu0 0
    %105 = vmatprep.mubr.bf16.mxu0 0
    %106 = vmatmul.mubr.bf16.gmra.mxu0 %v67
    %v107 = vpop.f32.mrf.mxu0
    %v108 = vadd.f32 %v63, %v107
    %v109 = vpop.f32.mrf.mxu0
    %v110 = vpop.f32.mrf.mxu0
    %v111 = vpop.f32.mrf.mxu0
    %112 = vdwg.mxu0
    %v113 = vxor.u32 %v108, 2147483648
    %v114 = vmul.f32 %v113, 1.442695
    %v115 = vpow.pop %v114
    %v116 = vadd.f32 %v115, 1.0
    %v117 = vrcp.pop %v116
    %v118 = vmul.f32 1.0, %v117
    %v119 = vpack.c.bf16 %v118, %v118
    %v120 = vld [vmem:[#allocation2] sm:$0xf]
    %v121 = vld [vmem:[#allocation2 + $0x4] sm:$0xf]
    %v122 = vld [vmem:[#allocation2 + $0x8] sm:$0xf]
    %v123 = vld [vmem:[#allocation2 + $0xc] sm:$0xf]
    %v124 = vld [vmem:[#allocation2 + $0x10] sm:$0xf]
    %v125 = vld [vmem:[#allocation2 + $0x14] sm:$0xf]
    %v126 = vld [vmem:[#allocation2 + $0x18] sm:$0xf]
    %v127 = vld [vmem:[#allocation2 + $0x1c] sm:$0xf]
    %v128 = vld [vmem:[#allocation2 + $0x20] sm:$0xf]
    %v129 = vld [vmem:[#allocation2 + $0x24] sm:$0xf]
    %v130 = vld [vmem:[#allocation2 + $0x28] sm:$0xf]
    %v131 = vld [vmem:[#allocation2 + $0x2c] sm:$0xf]
    %v132 = vld [vmem:[#allocation2 + $0x30] sm:$0xf]
    %v133 = vld [vmem:[#allocation2 + $0x34] sm:$0xf]
    %v134 = vld [vmem:[#allocation2 + $0x38] sm:$0xf]
    %v135 = vld [vmem:[#allocation2 + $0x3c] sm:$0xf]
    %v136 = vld [vmem:[%s4] sm:$0x1]
    %v138 = vlaneseq
    %v139 = vshrl.u32 %v138, 7
    %v140 = vsub.s32 0, %v139
    %v141 = vrot.slane %v136, %v140
    %v159 = vunpack.c.l.b16 %v120
    %v160 = vunpack.c.l.b16 %v121
    %v161 = vunpack.c.l.b16 %v122
    %v162 = vunpack.c.l.b16 %v123
    %v163 = vunpack.c.l.b16 %v124
    %v164 = vunpack.c.l.b16 %v125
    %v165 = vunpack.c.l.b16 %v126
    %v166 = vunpack.c.l.b16 %v127
    %v167 = vunpack.c.l.b16 %v128
    %v168 = vunpack.c.l.b16 %v129
    %v169 = vunpack.c.l.b16 %v130
    %v170 = vunpack.c.l.b16 %v131
    %v171 = vunpack.c.l.b16 %v132
    %v172 = vunpack.c.l.b16 %v133
    %v173 = vunpack.c.l.b16 %v134
    %v174 = vunpack.c.l.b16 %v135
    %v175 = vpack.c.b16 %v160, %v159
    %v176 = vpack.c.b16 %v162, %v161
    %v177 = vpack.c.b16 %v164, %v163
    %v178 = vpack.c.b16 %v166, %v165
    %v179 = vpack.c.b16 %v168, %v167
    %v180 = vpack.c.b16 %v170, %v169
    %v181 = vpack.c.b16 %v172, %v171
    %v182 = vpack.c.b16 %v174, %v173
    %191 = vmatprep.subr.bf16.mxu0 0
    %192 = vmatpush1.bf16.msra.mxu0 %v182
    %193 = vmatprep.subr.bf16.mxu0 0
    %194 = vmatpush1.bf16.msra.mxu0 %v181
    %195 = vmatprep.subr.bf16.mxu0 0
    %196 = vmatpush1.bf16.msra.mxu0 %v180
    %197 = vmatprep.subr.bf16.mxu0 0
    %198 = vmatpush1.bf16.msra.mxu0 %v179
    %199 = vmatprep.subr.bf16.mxu0 0
    %200 = vmatpush1.bf16.msra.mxu0 %v178
    %201 = vmatprep.subr.bf16.mxu0 0
    %202 = vmatpush1.bf16.msra.mxu0 %v177
    %203 = vmatprep.subr.bf16.mxu0 0
    %204 = vmatpush1.bf16.msra.mxu0 %v176
    %205 = vmatprep.subr.bf16.mxu0 0
    %206 = vmatpush1.bf16.msra.mxu0 %v175
    %207 = vmatprep.subr.bf16.mxu0 0
    %208 = vmatpush2.bf16.msra.mxu0 0
    %209 = vmatprep.subr.bf16.mxu0 0
    %210 = vmatpush2.bf16.msra.mxu0 0
    %211 = vmatprep.subr.bf16.mxu0 0
    %212 = vmatpush2.bf16.msra.mxu0 0
    %213 = vmatprep.subr.bf16.mxu0 0
    %214 = vmatpush2.bf16.msra.mxu0 0
    %215 = vmatprep.subr.bf16.mxu0 0
    %216 = vmatpush2.bf16.msra.mxu0 0
    %217 = vmatprep.subr.bf16.mxu0 0
    %218 = vmatpush2.bf16.msra.mxu0 0
    %219 = vmatprep.subr.bf16.mxu0 0
    %220 = vmatpush2.bf16.msra.mxu0 0
    %221 = vmatprep.subr.bf16.mxu0 0
    %222 = vmatpush2.bf16.msra.mxu0 0
    %223 = vmatprep.mubr.bf16.mxu0 0
    %224 = vmatmul.mubr.bf16.gmra.mxu0 %v119
    %v225 = vpop.f32.mrf.mxu0
    %v226 = vadd.f32 %v141, %v225
    %v227 = vpop.f32.mrf.mxu0
    %v228 = vpop.f32.mrf.mxu0
    %v229 = vpop.f32.mrf.mxu0
    %230 = vdwg.mxu0
    %v231 = vpack.c.bf16 %v226, %v226
    %v232 = vld [vmem:[#allocation5] sm:$0xf]
    %v233 = vld [vmem:[#allocation5 + $0x4] sm:$0xf]
    %v234 = vld [vmem:[#allocation5 + $0x8] sm:$0xf]
    %v235 = vld [vmem:[#allocation5 + $0xc] sm:$0xf]
    %v236 = vld [vmem:[#allocation5 + $0x10] sm:$0xf]
    %v237 = vld [vmem:[#allocation5 + $0x14] sm:$0xf]
    %v238 = vld [vmem:[#allocation5 + $0x18] sm:$0xf]
    %v239 = vld [vmem:[#allocation5 + $0x1c] sm:$0xf]
    %v240 = vld [vmem:[#allocation5 + $0x20] sm:$0xf]
    %v241 = vld [vmem:[#allocation5 + $0x24] sm:$0xf]
    %v242 = vld [vmem:[#allocation5 + $0x28] sm:$0xf]
    %v243 = vld [vmem:[#allocation5 + $0x2c] sm:$0xf]
    %v244 = vld [vmem:[#allocation5 + $0x30] sm:$0xf]
    %v245 = vld [vmem:[#allocation5 + $0x34] sm:$0xf]
    %v246 = vld [vmem:[#allocation5 + $0x38] sm:$0xf]
    %v247 = vld [vmem:[#allocation5 + $0x3c] sm:$0xf]
    %v248 = vld [vmem:[%s6] sm:$0x1]
    %v250 = vlaneseq
    %v251 = vshrl.u32 %v250, 7
    %v252 = vsub.s32 0, %v251
    %v253 = vrot.slane %v248, %v252
    %v271 = vunpack.c.l.b16 %v232
    %v272 = vunpack.c.l.b16 %v233
    %v273 = vunpack.c.l.b16 %v234
    %v274 = vunpack.c.l.b16 %v235
    %v275 = vunpack.c.l.b16 %v236
    %v276 = vunpack.c.l.b16 %v237
    %v277 = vunpack.c.l.b16 %v238
    %v278 = vunpack.c.l.b16 %v239
    %v279 = vunpack.c.l.b16 %v240
    %v280 = vunpack.c.l.b16 %v241
    %v281 = vunpack.c.l.b16 %v242
    %v282 = vunpack.c.l.b16 %v243
    %v283 = vunpack.c.l.b16 %v244
    %v284 = vunpack.c.l.b16 %v245
    %v285 = vunpack.c.l.b16 %v246
    %v286 = vunpack.c.l.b16 %v247
    %v287 = vpack.c.b16 %v272, %v271
    %v288 = vpack.c.b16 %v274, %v273
    %v289 = vpack.c.b16 %v276, %v275
    %v290 = vpack.c.b16 %v278, %v277
    %v291 = vpack.c.b16 %v280, %v279
    %v292 = vpack.c.b16 %v282, %v281
    %v293 = vpack.c.b16 %v284, %v283
    %v294 = vpack.c.b16 %v286, %v285
    %303 = vmatprep.subr.bf16.mxu0 0
    %304 = vmatpush1.bf16.msra.mxu0 %v294
    %305 = vmatprep.subr.bf16.mxu0 0
    %306 = vmatpush1.bf16.msra.mxu0 %v293
    %307 = vmatprep.subr.bf16.mxu0 0
    %308 = vmatpush1.bf16.msra.mxu0 %v292
    %309 = vmatprep.subr.bf16.mxu0 0
    %310 = vmatpush1.bf16.msra.mxu0 %v291
    %311 = vmatprep.subr.bf16.mxu0 0
    %312 = vmatpush1.bf16.msra.mxu0 %v290
    %313 = vmatprep.subr.bf16.mxu0 0
    %314 = vmatpush1.bf16.msra.mxu0 %v289
    %315 = vmatprep.subr.bf16.mxu0 0
    %316 = vmatpush1.bf16.msra.mxu0 %v288
    %317 = vmatprep.subr.bf16.mxu0 0
    %318 = vmatpush1.bf16.msra.mxu0 %v287
    %319 = vmatprep.subr.bf16.mxu0 0
    %320 = vmatpush2.bf16.msra.mxu0 0
    %321 = vmatprep.subr.bf16.mxu0 0
    %322 = vmatpush2.bf16.msra.mxu0 0
    %323 = vmatprep.subr.bf16.mxu0 0
    %324 = vmatpush2.bf16.msra.mxu0 0
    %325 = vmatprep.subr.bf16.mxu0 0
    %326 = vmatpush2.bf16.msra.mxu0 0
    %327 = vmatprep.subr.bf16.mxu0 0
    %328 = vmatpush2.bf16.msra.mxu0 0
    %329 = vmatprep.subr.bf16.mxu0 0
    %330 = vmatpush2.bf16.msra.mxu0 0
    %331 = vmatprep.subr.bf16.mxu0 0
    %332 = vmatpush2.bf16.msra.mxu0 0
    %333 = vmatprep.subr.bf16.mxu0 0
    %334 = vmatpush2.bf16.msra.mxu0 0
    %335 = vmatprep.mubr.bf16.mxu0 0
    %336 = vmatmul.mubr.bf16.gmra.mxu0 %v231
    %v337 = vpop.f32.mrf.mxu0
    %v338 = vadd.f32 %v253, %v337
    %v339 = vpop.f32.mrf.mxu0
    %v340 = vpop.f32.mrf.mxu0
    %v341 = vpop.f32.mrf.mxu0
    %342 = vdwg.mxu0
    %v343 = vlaneseq
    %v344 = vand.u32 %v343, 127
    %vm345 = vcmp.lt.s32.totalorder %v344, 2
    %v346 = vsel %vm345, %v338, -1e+30
    %347 = vmax.xlane.f32.xlu0 %v346
    %v348 = vpop.xlane.xlu0 %347
    %v349 = vsub.f32 %v346, %v348
    %v350 = vmul.f32 %v349, 1.442695
    %v351 = vpow.pop %v350
    %352 = vadd.xlane.f32.xlu0 %v351
    %v353 = vpop.xlane.xlu0 %352
    %v354 = vrcp.pop %v353
    %v355 = vmul.f32 %v351, %v354
    %356 = vst [vmem:[#allocation7] sm:$0xff] %v355
    // Predicated region
    $region38: #{tpu_custom_call.1} parent=1 // pred_check
      _
    $region39: #{tpu_custom_call.1} parent=1 // pred_check_branch
      %358 = sbr.rel (0) target = $region41
    $region40: #{tpu_custom_call.1} parent=1 // pred_region
      %s360 = ssub.s32 128, 128
      %361 = vsyncadd [#allocation4], %s360
      %s363 = sshll.u32 [#allocation7], 4
      %s364 = int_to_ptr.vmem [resolvable:$true] %s363
      %366 = dma.vmem_to_hbm [thread:$0]  %s364, 128, %s7, [#allocation4]
    $region41: #{tpu_custom_call.1} parent=1 // pred_fallthru
      _
    // Predicated region
    $region42: #{tpu_custom_call.1} parent=1 // pred_check
      _
    $region43: #{tpu_custom_call.1} parent=1 // pred_check_branch
      %368 = sbr.rel (0) target = $region45
    $region44: #{tpu_custom_call.1} parent=1 // pred_region
      %369 = dma.done [#allocation4], 128
    $region45: #{tpu_custom_call.1} parent=1 // pred_fallthru
      _
    %370 = vsyncpa [#allocation3], 1
    %371 = vsyncpa [#allocation6], 1
    %372 = vsyncpa [#allocation4], 1

</llo_original>
